<compile_context>
chip_gen: v6e
topology: v6e:2x2x1
jax: 0.10.0
libtpu: 0.0.40
codegen_flags: <defaults>
</compile_context>

<pallas_src>
import functools

import jax
import jax.numpy as jnp
from jax.experimental import pallas as pl
from jax.experimental.pallas import tpu as pltpu


# ----------------------------------------------------------------------------
# Helpers
# ----------------------------------------------------------------------------
def _round_up(n, m):
    return ((n + m - 1) // m) * m


def _pad2(x, shape):
    pads = [(0, s - d) for d, s in zip(x.shape, shape)]
    return jnp.pad(x, pads)


def _vmem_limit_bytes():
    """Scoped-VMEM request with headroom below physical VMEM.

    ~48 MiB on v7x (64 MiB / TC), ~96 MiB on v5e/v6e (128 MiB).  Conservative
    fallback if the hardware query is unavailable.
    """
    cap = 64 * 1024 * 1024
    try:
        cap = int(pltpu.get_tpu_info().vmem_capacity_bytes)
    except Exception:
        pass
    return min((cap * 3) // 4, 100 * 1024 * 1024)


def _pick_tile(dim_p, pref=512):
    """Largest MXU/lane-friendly tile <= pref dividing dim_p (dim_p % 128 == 0)."""
    if dim_p <= pref:
        return dim_p
    for cand in (pref, 256, 128):
        if dim_p % cand == 0:
            return cand
    return 128


def _choose_tile_b(B, tile_b):
    """Batch tile: MXU-aligned for large B, >=2 grid tiles when the batch
    allows it (v7x has 2 TensorCores), always a multiple of 8."""
    if B >= 2 * tile_b:
        return tile_b
    if B > 16:
        tb = _round_up(pl.cdiv(B, 2), 8)
        if tb >= 128:
            tb = _round_up(tb, 128)      # full systolic-array M occupancy
        return min(tb, tile_b)
    return _round_up(max(B, 1), 8)


# ----------------------------------------------------------------------------
# Stage 1: per-layer masked weight (w_eff) + regularizer.  Batch-independent,
# hoisted out of the batch-tiled path; tiled over (n_in, n_hid) so it scales
# to large n_input on 64 MiB-VMEM parts.
# ----------------------------------------------------------------------------
def _layer_weights_kernel(w_ref, u_ref, vt_ref, w_eff_ref, reg_ref, *,
                          n_in, n_hid, tile_in, tile_hid, lambda_o, lambda_2):
    i = pl.program_id(0)
    j = pl.program_id(1)

    @pl.when(jnp.logical_and(i == 0, j == 0))
    def _():
        reg_ref[0, 0] = jnp.float32(0.0)

    u = u_ref[...].astype(jnp.float32)        # (tile_in, n_dim_p)
    vt = vt_ref[...].astype(jnp.float32)      # (n_dim_p, tile_hid), pre-transposed

    # ||u_i - v_j||^2 = ||u_i||^2 + ||v_j||^2 - 2 u_i . v_j  (MXU for the dot,
    # v_sq is a sublane-axis reduction of vt -> no in-kernel transpose).
    u_sq = jnp.sum(u * u, axis=1, keepdims=True)              # (tile_in, 1)
    v_sq = jnp.sum(vt * vt, axis=0, keepdims=True)            # (1, tile_hid)
    uv = jnp.dot(u, vt, preferred_element_type=jnp.float32)   # (tile_in, tile_hid)
    dist2 = jnp.maximum(u_sq + v_sq - 2.0 * uv, 0.0)          # clamp fp drift
    w_hat = jnp.maximum(0.0, 1.0 - dist2)

    # Mask zero-padded rows/cols (padded u/v rows are zero => dist2=0 =>
    # w_hat=1 there, which must not leak into reg or w_eff).
    row = jax.lax.broadcasted_iota(jnp.int32, w_hat.shape, 0) + i * tile_in
    col = jax.lax.broadcasted_iota(jnp.int32, w_hat.shape, 1) + j * tile_hid
    w_hat = jnp.where((row < n_in) & (col < n_hid), w_hat, 0.0)

    w = w_ref[...].astype(jnp.float32)                         # zero-padded W tile
    w_eff = w * w_hat
    w_eff_ref[...] = w_eff.astype(w_eff_ref.dtype)             # bf16 for the MXU

    reg_ref[0, 0] += (lambda_o * jnp.sum(w_hat * w_hat)
                      + lambda_2 * jnp.sum(w * w))


def compute_layer_weights(W, u, v, *, lambda_o, lambda_2,
                          compute_dtype=jnp.bfloat16, vmem_limit=None):
    """Returns (w_eff_padded[compute_dtype], reg scalar) for one KernelLayer."""
    n_in, n_hid = W.shape
    n_dim = u.shape[1]
    n_in_p = _round_up(n_in, 128)
    n_hid_p = _round_up(n_hid, 128)
    n_dim_p = _round_up(n_dim, 8)
    tile_in = _pick_tile(n_in_p)
    tile_hid = _pick_tile(n_hid_p)

    W_p = _pad2(W.astype(jnp.float32), (n_in_p, n_hid_p))
    u_p = _pad2(u.astype(jnp.float32), (n_in_p, n_dim_p))
    vt_p = _pad2(jnp.transpose(v.astype(jnp.float32)), (n_dim_p, n_hid_p))

    kern = functools.partial(
        _layer_weights_kernel,
        n_in=int(n_in), n_hid=int(n_hid),
        tile_in=int(tile_in), tile_hid=int(tile_hid),
        lambda_o=float(lambda_o), lambda_2=float(lambda_2))

    w_eff, reg = pl.pallas_call(
        kern,
        grid=(n_in_p // tile_in, n_hid_p // tile_hid),
        in_specs=[pl.BlockSpec((tile_in, tile_hid), lambda i, j: (i, j)),
                  pl.BlockSpec((tile_in, n_dim_p), lambda i, j: (i, 0)),
                  pl.BlockSpec((n_dim_p, tile_hid), lambda i, j: (0, j))],
        out_specs=(pl.BlockSpec((tile_in, tile_hid), lambda i, j: (i, j)),
                   pl.BlockSpec((1, 1), lambda i, j: (0, 0),
                                memory_space=pltpu.MemorySpace.SMEM)),
        out_shape=(jax.ShapeDtypeStruct((n_in_p, n_hid_p), compute_dtype),
                   jax.ShapeDtypeStruct((1, 1), jnp.float32)),
        compiler_params=pltpu.CompilerParams(
            dimension_semantics=("arbitrary", "arbitrary"),  # reg accumulator
            vmem_limit_bytes=vmem_limit),
    )(W_p, u_p, vt_p)
    return w_eff, reg[0, 0]


# ----------------------------------------------------------------------------
# Stage 2: fused layer stack over batch tiles.  Per-layer w_eff / b resident
# (constant index maps, single-buffered when supported); activations carried
# in compute_dtype and never touch HBM between layers.
# ----------------------------------------------------------------------------
def _stack_kernel(x_ref, *refs, num_layers, compute_dtype):
    y_ref = refs[-1]
    y = x_ref[...]                                            # (TB, n_in_p), bf16
    for li in range(num_layers):
        w_eff = refs[2 * li][...]                             # bf16, resident
        b = refs[2 * li + 1][...].astype(jnp.float32)         # (1, d_out_p)
        z = jnp.dot(y, w_eff, preferred_element_type=jnp.float32) + b
        if li != num_layers - 1:
            # sigmoid(z) = 0.5*(tanh(0.5 z)+1): tanh rides the EUP slot, no
            # VPU divide; stored activation narrowed to compute_dtype.
            y = (0.5 * (jnp.tanh(0.5 * z) + 1.0)).astype(compute_dtype)
        else:
            y = z                                             # identity last layer
    y_ref[...] = y.astype(y_ref.dtype)


def _stack_forward(x_p, w_effs, biases_p, *, out_dtype, compute_dtype, tile_b,
                   vmem_limit, single_buffer_weights):
    B_p, n_in_p = x_p.shape
    num_layers = len(w_effs)
    n_out_p = w_effs[-1].shape[1]

    def const_spec(shape):
        idx = lambda i: (0, 0)
        if single_buffer_weights:
            # Constant-index operands never change across the batch grid:
            # single-buffer them (halves resident-weight VMEM; matters on v7x).
            return pl.BlockSpec(shape, idx, pipeline_mode=pl.Buffered(1))
        return pl.BlockSpec(shape, idx)

    in_specs = [pl.BlockSpec((tile_b, n_in_p), lambda i: (i, 0))]
    args = [x_p]
    for w_eff, b in zip(w_effs, biases_p):
        in_specs.append(const_spec(w_eff.shape))
        in_specs.append(const_spec(b.shape))
        args += [w_eff, b]

    kern = functools.partial(_stack_kernel, num_layers=num_layers,
                             compute_dtype=compute_dtype)
    return pl.pallas_call(
        kern,
        grid=(B_p // tile_b,),
        in_specs=in_specs,
        out_specs=pl.BlockSpec((tile_b, n_out_p), lambda i: (i, 0)),
        out_shape=jax.ShapeDtypeStruct((B_p, n_out_p), out_dtype),
        compiler_params=pltpu.CompilerParams(
            dimension_semantics=("parallel",),      # megacore-shard batch tiles
            vmem_limit_bytes=vmem_limit),
    )(*args)


# ----------------------------------------------------------------------------
# MultiLayerKernelNet: parameter construction + full forward.
# ----------------------------------------------------------------------------
def init_multilayer_kernelnet(key, n_input, kernel_hidden=500, kernel_layers=2,
                              n_dim=5):
    """W: (n_in, n_hid), u: (n_in, n_dim), v: (n_hid, n_dim), b: (1, n_hid)."""
    dims = [(n_input, kernel_hidden)]
    dims += [(kernel_hidden, kernel_hidden)] * (kernel_layers - 1)
    dims += [(kernel_hidden, n_input)]

    params = []
    for li, (n_in, n_hid) in enumerate(dims):
        k = jax.random.fold_in(key, li)
        kw, ku, kv, kb = jax.random.split(k, 4)
        params.append(dict(
            W=(jax.random.normal(kw, (n_in, n_hid), jnp.float32) * 0.1),
            u=(jax.random.normal(ku, (n_in, n_dim), jnp.float32) * 0.1),
            v=(jax.random.normal(kv, (n_hid, n_dim), jnp.float32) * 0.1),
            b=(jax.random.normal(kb, (1, n_hid), jnp.float32) * 0.1),
        ))
    return params


def multilayer_kernelnet_forward(params, x, *, lambda_o=0.013, lambda_2=60.0,
                                 compute_dtype=jnp.bfloat16, out_dtype=None,
                                 tile_b=None):
    B, n_in0 = x.shape
    assert n_in0 == params[0]["W"].shape[0]
    n_out_true = params[-1]["W"].shape[1]
    out_dtype = compute_dtype if out_dtype is None else out_dtype
    vmem_limit = _vmem_limit_bytes()

    # Stage 1: hoisted, batch-independent weight/reg computation (runs once).
    w_effs, biases_p, total_reg = [], [], None
    for p in params:
        w_eff, reg = compute_layer_weights(
            p["W"], p["u"], p["v"],
            lambda_o=lambda_o, lambda_2=lambda_2,
            compute_dtype=compute_dtype, vmem_limit=vmem_limit)
        w_effs.append(w_eff)
        biases_p.append(_pad2(p["b"].astype(jnp.float32),
                              (1, w_eff.shape[1])))
        total_reg = reg if total_reg is None else total_reg + reg

    # Stage 2: fused, batch-tiled layer stack.
    n_in_p = w_effs[0].shape[0]
    if tile_b is None:
        # Bigger tiles on 128 MiB parts (v5e/v6e) when the feature dim is
        # moderate; stay at 256 on v7x (64 MiB / TC).
        tile_b = 512 if (vmem_limit >= 72 * 1024 * 1024
                         and n_in_p <= 4096) else 256
    tb = _choose_tile_b(B, tile_b)
    B_p = _round_up(B, tb)

    # Feed activations to Stage 2 already in compute_dtype: halves the x DMA
    # bytes / double-buffer VMEM and skips a per-tile f32->bf16 cast.
    x_p = _pad2(x.astype(compute_dtype), (B_p, n_in_p))

    kwargs = dict(out_dtype=out_dtype, compute_dtype=compute_dtype, tile_b=tb,
                  vmem_limit=vmem_limit)
    try:
        y_p = _stack_forward(x_p, w_effs, biases_p,
                             single_buffer_weights=True, **kwargs)
    except Exception:
        # pipeline_mode=pl.Buffered(1) unavailable/unsupported on this jax
        # version: fall back to default double-buffered resident weights
        # (correct, just more VMEM).
        y_p = _stack_forward(x_p, w_effs, biases_p,
                             single_buffer_weights=False, **kwargs)
    return y_p[:B, :n_out_true], total_reg


# ----------------------------------------------------------------------------
# Pure-JAX reference (correctness sanity check).
# ----------------------------------------------------------------------------
def _ref_forward(params, x, *, lambda_o=0.013, lambda_2=60.0):
    total_reg = None
    y = x
    n_layers = len(params)
    for li, p in enumerate(params):
        u, v, W, b = p["u"], p["v"], p["W"], p["b"]
        diff = u[:, None, :] - v[None, :, :]            # (n_in, n_hid, n_dim)
        dist2 = jnp.sum(diff * diff, axis=2)
        w_hat = jnp.maximum(0.0, 1.0 - dist2)
        w_eff = W * w_hat
        z = y @ w_eff + b
        y = jax.nn.sigmoid(z) if li != n_layers - 1 else z
        reg = lambda_o * jnp.sum(w_hat ** 2) + lambda_2 * jnp.sum(W ** 2)
        total_reg = reg if total_reg is None else total_reg + reg
    return y, total_reg


if __name__ == "__main__":
    key = jax.random.PRNGKey(0)
    k_params, k_x = jax.random.split(key)

    # Small, module-consistent shapes: x is (batch, n_input)
    batch, n_input, kernel_hidden, kernel_layers = 8, 32, 32, 2

    params = init_multilayer_kernelnet(
        k_params, n_input, kernel_hidden=kernel_hidden,
        kernel_layers=kernel_layers, n_dim=5)
    x = jax.random.normal(k_x, (batch, n_input), jnp.float32)

    y, total_reg = multilayer_kernelnet_forward(params, x)
    y = jax.block_until_ready(y)
    total_reg = jax.block_until_ready(total_reg)

    y_ref, reg_ref = _ref_forward(params, x)
    assert y.shape == (batch, n_input)
    # bf16 MXU operands / bf16 output store (f32 accumulation) => loose tol.
    assert jnp.allclose(y.astype(jnp.float32), y_ref, rtol=5e-2, atol=5e-2)
    assert jnp.allclose(total_reg, reg_ref, rtol=1e-3, atol=1e-2)

    print("KERNEL_OK")
</pallas_src>

<mosaic_0001>
module attributes {stable_mosaic.version = 11 : i64} {
  func.func @_layer_weights_kernel(%arg0: i32, %arg1: i32, %arg2: memref<128x128xf32, #tpu.memory_space<vmem>>, %arg3: memref<128x8xf32, #tpu.memory_space<vmem>>, %arg4: memref<8x128xf32, #tpu.memory_space<vmem>>, %arg5: memref<128x128xbf16, #tpu.memory_space<vmem>>, %arg6: memref<1x1xf32, #tpu.memory_space<smem>>) attributes {dimension_semantics = [#tpu.dimension_semantics<arbitrary>, #tpu.dimension_semantics<arbitrary>], iteration_bounds = array<i64: 1, 1>, scalar_prefetch = 0 : i64, scratch_operands = 0 : i64, tpu.core_type = #tpu.core_type<tc>, window_params = [{transform_indices = @transform_0, window_bounds = array<i64: 128, 128>}, {transform_indices = @transform_1, window_bounds = array<i64: 128, 8>}, {transform_indices = @transform_2, window_bounds = array<i64: 8, 128>}, {transform_indices = @transform_3, window_bounds = array<i64: 128, 128>}, {transform_indices = @transform_4, window_bounds = array<i64: 1, 1>}]} {
    %c0_i32 = arith.constant 0 : i32
    %0 = arith.cmpi eq, %arg0, %c0_i32 : i32
    %c0_i32_0 = arith.constant 0 : i32
    %1 = arith.cmpi eq, %arg1, %c0_i32_0 : i32
    %2 = arith.andi %0, %1 : i1
    %3 = arith.extui %2 : i1 to i32
    %c0_i32_1 = arith.constant 0 : i32
    %4 = arith.cmpi ne, %3, %c0_i32_1 : i32
    scf.if %4 {
      %cst_26 = arith.constant 0.000000e+00 : f32
      %c0_27 = arith.constant 0 : index
      %c0_28 = arith.constant 0 : index
      %61 = memref.load %arg6[%c0_27, %c0_28] : memref<1x1xf32, #tpu.memory_space<smem>>
      memref.store %cst_26, %arg6[%c0_27, %c0_28] : memref<1x1xf32, #tpu.memory_space<smem>>
    } else {
    }
    %c0 = arith.constant 0 : index
    %c0_2 = arith.constant 0 : index
    %5 = vector.load %arg3[%c0, %c0_2] : memref<128x8xf32, #tpu.memory_space<vmem>>, vector<128x8xf32>
    %c0_3 = arith.constant 0 : index
    %c0_4 = arith.constant 0 : index
    %6 = vector.load %arg4[%c0_3, %c0_4] : memref<8x128xf32, #tpu.memory_space<vmem>>, vector<8x128xf32>
    %7 = arith.mulf %5, %5 : vector<128x8xf32>
    %cst = arith.constant dense<0.000000e+00> : vector<128xf32>
    %8 = vector.multi_reduction <add>, %7, %cst [1] : vector<128x8xf32> to vector<128xf32>
    %9 = vector.shape_cast %8 : vector<128xf32> to vector<128x1xf32>
    %10 = arith.mulf %6, %6 : vector<8x128xf32>
    %cst_5 = arith.constant dense<0.000000e+00> : vector<128xf32>
    %11 = vector.multi_reduction <add>, %10, %cst_5 [0] : vector<8x128xf32> to vector<128xf32>
    %12 = vector.shape_cast %11 : vector<128xf32> to vector<1x128xf32>
    %cst_6 = arith.constant dense<0.000000e+00> : vector<128x128xf32>
    %13 = tpu.matmul %5, %6, %cst_6 {dimension_numbers = #tpu.dot_dimension_numbers<[1], [0], [0], [1], [0, 0, 1, 1], [], []>} : vector<128x8xf32>, vector<8x128xf32>, vector<128x128xf32> -> vector<128x128xf32>
    %14 = vector.broadcast %9 : vector<128x1xf32> to vector<128x128xf32>
    %15 = vector.broadcast %12 : vector<1x128xf32> to vector<128x128xf32>
    %16 = arith.addf %14, %15 : vector<128x128xf32>
    %cst_7 = arith.constant 2.000000e+00 : f32
    %17 = vector.broadcast %cst_7 : f32 to vector<128x128xf32>
    %18 = arith.mulf %17, %13 : vector<128x128xf32>
    %19 = arith.subf %16, %18 : vector<128x128xf32>
    %cst_8 = arith.constant 0.000000e+00 : f32
    %20 = vector.broadcast %cst_8 : f32 to vector<128x128xf32>
    %21 = arith.maximumf %19, %20 : vector<128x128xf32>
    %cst_9 = arith.constant 1.000000e+00 : f32
    %22 = vector.broadcast %cst_9 : f32 to vector<128x128xf32>
    %23 = arith.subf %22, %21 : vector<128x128xf32>
    %cst_10 = arith.constant 0.000000e+00 : f32
    %24 = vector.broadcast %cst_10 : f32 to vector<128x128xf32>
    %25 = arith.maximumf %24, %23 : vector<128x128xf32>
    %26 = tpu.iota {dimensions = array<i32: 0>} : vector<128x128xi32>
    %c128_i32 = arith.constant 128 : i32
    %27 = arith.muli %arg0, %c128_i32 : i32
    %28 = vector.broadcast %27 : i32 to vector<128x128xi32>
    %29 = arith.addi %26, %28 : vector<128x128xi32>
    %30 = tpu.iota {dimensions = array<i32: 1>} : vector<128x128xi32>
    %c128_i32_11 = arith.constant 128 : i32
    %31 = arith.muli %arg1, %c128_i32_11 : i32
    %32 = vector.broadcast %31 : i32 to vector<128x128xi32>
    %33 = arith.addi %30, %32 : vector<128x128xi32>
    %c32_i32 = arith.constant 32 : i32
    %34 = vector.broadcast %c32_i32 : i32 to vector<128x128xi32>
    %35 = arith.cmpi slt, %29, %34 : vector<128x128xi32>
    %c32_i32_12 = arith.constant 32 : i32
    %36 = vector.broadcast %c32_i32_12 : i32 to vector<128x128xi32>
    %37 = arith.cmpi slt, %33, %36 : vector<128x128xi32>
    %38 = arith.andi %35, %37 : vector<128x128xi1>
    %cst_13 = arith.constant 0.000000e+00 : f32
    %39 = vector.broadcast %cst_13 : f32 to vector<128x128xf32>
    %40 = arith.select %38, %25, %39 : vector<128x128xi1>, vector<128x128xf32>
    %c0_14 = arith.constant 0 : index
    %c0_15 = arith.constant 0 : index
    %41 = vector.load %arg2[%c0_14, %c0_15] : memref<128x128xf32, #tpu.memory_space<vmem>>, vector<128x128xf32>
    %42 = arith.mulf %41, %40 : vector<128x128xf32>
    %43 = arith.truncf %42 : vector<128x128xf32> to vector<128x128xbf16>
    %c0_16 = arith.constant 0 : index
    %c0_17 = arith.constant 0 : index
    %44 = vector.load %arg5[%c0_16, %c0_17] : memref<128x128xbf16, #tpu.memory_space<vmem>>, vector<128x128xbf16>
    tpu.vector_store %arg5[%c0_16, %c0_17], %43 {strides = array<i32>} : memref<128x128xbf16, #tpu.memory_space<vmem>>, vector<128x128xbf16>,
    %c0_18 = arith.constant 0 : index
    %c0_19 = arith.constant 0 : index
    %45 = memref.load %arg6[%c0_18, %c0_19] : memref<1x1xf32, #tpu.memory_space<smem>>
    %46 = arith.mulf %40, %40 : vector<128x128xf32>
    %47 = vector.shape_cast %46 : vector<128x128xf32> to vector<1x128x128xf32>
    %cst_20 = arith.constant dense<0.000000e+00> : vector<1xf32>
    %48 = vector.multi_reduction <add>, %47, %cst_20 [1, 2] : vector<1x128x128xf32> to vector<1xf32>
    %49 = vector.shape_cast %48 : vector<1xf32> to vector<1x1x1xf32>
    %50 = vector.extract %49[0, 0, 0] : f32 from vector<1x1x1xf32>
    %cst_21 = arith.constant 1.300000e-02 : f32
    %51 = arith.mulf %cst_21, %50 : f32
    %52 = arith.mulf %41, %41 : vector<128x128xf32>
    %53 = vector.shape_cast %52 : vector<128x128xf32> to vector<1x128x128xf32>
    %cst_22 = arith.constant dense<0.000000e+00> : vector<1xf32>
    %54 = vector.multi_reduction <add>, %53, %cst_22 [1, 2] : vector<1x128x128xf32> to vector<1xf32>
    %55 = vector.shape_cast %54 : vector<1xf32> to vector<1x1x1xf32>
    %56 = vector.extract %55[0, 0, 0] : f32 from vector<1x1x1xf32>
    %cst_23 = arith.constant 6.000000e+01 : f32
    %57 = arith.mulf %cst_23, %56 : f32
    %58 = arith.addf %51, %57 : f32
    %59 = arith.addf %45, %58 : f32
    %c0_24 = arith.constant 0 : index
    %c0_25 = arith.constant 0 : index
    %60 = memref.load %arg6[%c0_24, %c0_25] : memref<1x1xf32, #tpu.memory_space<smem>>
    memref.store %59, %arg6[%c0_24, %c0_25] : memref<1x1xf32, #tpu.memory_space<smem>>
    return
  }
  func.func @transform_0(%arg0: i32, %arg1: i32) -> (i32, i32) {
    %c0_i32 = arith.constant 0 : i32
    return %arg0, %arg1 : i32, i32
  }
  func.func @transform_1(%arg0: i32, %arg1: i32) -> (i32, i32) {
    %c0_i32 = arith.constant 0 : i32
    %c0_i32_0 = arith.constant 0 : i32
    return %arg0, %c0_i32 : i32, i32
  }
  func.func @transform_2(%arg0: i32, %arg1: i32) -> (i32, i32) {
    %c0_i32 = arith.constant 0 : i32
    %c0_i32_0 = arith.constant 0 : i32
    return %c0_i32, %arg1 : i32, i32
  }
  func.func @transform_3(%arg0: i32, %arg1: i32) -> (i32, i32) {
    %c0_i32 = arith.constant 0 : i32
    return %arg0, %arg1 : i32, i32
  }
  func.func @transform_4(%arg0: i32, %arg1: i32) -> (i32, i32) {
    %c0_i32 = arith.constant 0 : i32
    %c0_i32_0 = arith.constant 0 : i32
    %c0_i32_1 = arith.constant 0 : i32
    return %c0_i32, %c0_i32_0 : i32, i32
  }
}

</mosaic_0001>

<llo_original>
// kernel: tpu_custom_call.1
$region0: #{tpu_custom_call.1}
  #allocation0 [shape = 'u32[]', space=smem, size = 0x4, offset = 0x4, fixed_abs, tag = 'smem constant byte address 0x4 - core index']
  #allocation1 [shape = 'u32[144,128]{1,0:T(1,128)}', space=vmem, size = 0x12000, scoped, tag = 'internal scratch']
  %s0 = inlined_call_operand.vmem [shape: f32[128,128], index: 0, kind: input, shape index: {}]
  %s1 = inlined_call_operand.vmem [shape: f32[128,8], index: 1, kind: input, shape index: {}]
  %s2 = inlined_call_operand.vmem [shape: f32[8,128], index: 2, kind: input, shape index: {}]
  %s3 = inlined_call_operand.hbm [shape: bf16[128,128], index: 3, kind: output, shape index: {0}]
  %s4 = inlined_call_operand.hbm [shape: f32[1,1], index: 4, kind: output, shape index: {1}]
  %5 = xla_tuple %s3, %s4
  %s6 = sld [smem:[#allocation0]]
  $region34: #{tpu_custom_call.1} parent=0
    _
  %s8 = ssub.s32 1, %s6
  %s9 = scalar_select 0, %s8, %s6
  $region1: #{tpu_custom_call.1} parent=0
    #allocation2 [shape = 'u8[32768]{0}', space=vmem, size = 0x8000, scoped, tag = 'output window, operand 0, single buffered']
    #allocation3 [shape = 's32[1]{0}', space=sflag, size = 0x4, scoped, tag = 'scoped memory for tpu_custom_call.1']
    #allocation4 [shape = 's32[1]{0}', space=sflag, size = 0x4, scoped, tag = 'scoped memory for tpu_custom_call.1']
    #allocation5 [shape = 'u8[512]{0}', space=smem, size = 0x200, scoped, tag = 'output window, operand 1, single buffered']
    %10 = vsyncpa [#allocation3], 0
    %11 = vsyncpa [#allocation4], 0
    // Predicated region
    $region2: #{tpu_custom_call.1} parent=1 // pred_check
      _
    $region3: #{tpu_custom_call.1} parent=1 // pred_check_branch
      %13 = sbr.rel (0) target = $region5
    $region4: #{tpu_custom_call.1} parent=1 // pred_region
      _
    $region5: #{tpu_custom_call.1} parent=1 // pred_fallthru
      _
    // Predicated region
    $region6: #{tpu_custom_call.1} parent=1 // pred_check
      _
    $region7: #{tpu_custom_call.1} parent=1 // pred_check_branch
      %15 = sbr.rel (0) target = $region9
    $region8: #{tpu_custom_call.1} parent=1 // pred_region
      _
    $region9: #{tpu_custom_call.1} parent=1 // pred_fallthru
      _
    // Predicated region
    $region10: #{tpu_custom_call.1} parent=1 // pred_check
      _
    $region11: #{tpu_custom_call.1} parent=1 // pred_check_branch
      %17 = sbr.rel (0) target = $region13
    $region12: #{tpu_custom_call.1} parent=1 // pred_region
      _
    $region13: #{tpu_custom_call.1} parent=1 // pred_fallthru
      _
    %p18 = scmp.eq.s32.totalorder 0, 0
    %p19 = scmp.eq.s32.totalorder 0, 0
    %p20 = pnand %p18, %p19
    %p21 = pneg %p20
    // Predicated region
    $region14: #{tpu_custom_call.1} parent=1 // pred_check
      _
    $region15: #{tpu_custom_call.1} parent=1 // pred_check_branch
      %23 = sbr.rel (%p20) target = $region17
    $region16: #{tpu_custom_call.1} parent=1 // pred_region
      %s24 = scalar_lea.smem [#allocation5], 0
      %25 = sst [smem:[%s24]] 0.0
    $region17: #{tpu_custom_call.1} parent=1 // pred_fallthru
      _
    %v26 = vld [vmem:[%s1] sm:$0xff]
    %v27 = vld [vmem:[%s1 + $0x8] sm:$0xff]
    %v28 = vld [vmem:[%s1 + $0x10] sm:$0xff]
    %v29 = vld [vmem:[%s1 + $0x18] sm:$0xff]
    %v30 = vld [vmem:[%s1 + $0x20] sm:$0xff]
    %v31 = vld [vmem:[%s1 + $0x28] sm:$0xff]
    %v32 = vld [vmem:[%s1 + $0x30] sm:$0xff]
    %v33 = vld [vmem:[%s1 + $0x38] sm:$0xff]
    %v34 = vld [vmem:[%s1 + $0x40] sm:$0xff]
    %v35 = vld [vmem:[%s1 + $0x48] sm:$0xff]
    %v36 = vld [vmem:[%s1 + $0x50] sm:$0xff]
    %v37 = vld [vmem:[%s1 + $0x58] sm:$0xff]
    %v38 = vld [vmem:[%s1 + $0x60] sm:$0xff]
    %v39 = vld [vmem:[%s1 + $0x68] sm:$0xff]
    %v40 = vld [vmem:[%s1 + $0x70] sm:$0xff]
    %v41 = vld [vmem:[%s1 + $0x78] sm:$0xff]
    %v42 = vld [vmem:[%s2] sm:$0xff]
    %v43 = vmul.f32 %v26, %v26
    %v44 = vmul.f32 %v27, %v27
    %v45 = vmul.f32 %v28, %v28
    %v46 = vmul.f32 %v29, %v29
    %v47 = vmul.f32 %v30, %v30
    %v48 = vmul.f32 %v31, %v31
    %v49 = vmul.f32 %v32, %v32
    %v50 = vmul.f32 %v33, %v33
    %v51 = vmul.f32 %v34, %v34
    %v52 = vmul.f32 %v35, %v35
    %v53 = vmul.f32 %v36, %v36
    %v54 = vmul.f32 %v37, %v37
    %v55 = vmul.f32 %v38, %v38
    %v56 = vmul.f32 %v39, %v39
    %v57 = vmul.f32 %v40, %v40
    %v58 = vmul.f32 %v41, %v41
    %vm59 = vcmask 64512
    %v60 = vsel %vm59, %v43, 0.0
    %61 = vadd.xlane.f32.xlu0 %v60
    %v62 = vpop.xlane.xlu0 %61
    %v63 = vsel %vm59, %v44, 0.0
    %64 = vadd.xlane.f32.xlu0 %v63
    %v65 = vpop.xlane.xlu0 %64
    %v66 = vsel %vm59, %v45, 0.0
    %67 = vadd.xlane.f32.xlu0 %v66
    %v68 = vpop.xlane.xlu0 %67
    %v69 = vsel %vm59, %v46, 0.0
    %70 = vadd.xlane.f32.xlu0 %v69
    %v71 = vpop.xlane.xlu0 %70
    %v72 = vsel %vm59, %v47, 0.0
    %73 = vadd.xlane.f32.xlu0 %v72
    %v74 = vpop.xlane.xlu0 %73
    %v75 = vsel %vm59, %v48, 0.0
    %76 = vadd.xlane.f32.xlu0 %v75
    %v77 = vpop.xlane.xlu0 %76
    %v78 = vsel %vm59, %v49, 0.0
    %79 = vadd.xlane.f32.xlu0 %v78
    %v80 = vpop.xlane.xlu0 %79
    %v81 = vsel %vm59, %v50, 0.0
    %82 = vadd.xlane.f32.xlu0 %v81
    %v83 = vpop.xlane.xlu0 %82
    %v84 = vsel %vm59, %v51, 0.0
    %85 = vadd.xlane.f32.xlu0 %v84
    %v86 = vpop.xlane.xlu0 %85
    %v87 = vsel %vm59, %v52, 0.0
    %88 = vadd.xlane.f32.xlu0 %v87
    %v89 = vpop.xlane.xlu0 %88
    %v90 = vsel %vm59, %v53, 0.0
    %91 = vadd.xlane.f32.xlu0 %v90
    %v92 = vpop.xlane.xlu0 %91
    %v93 = vsel %vm59, %v54, 0.0
    %94 = vadd.xlane.f32.xlu0 %v93
    %v95 = vpop.xlane.xlu0 %94
    %v96 = vsel %vm59, %v55, 0.0
    %97 = vadd.xlane.f32.xlu0 %v96
    %v98 = vpop.xlane.xlu0 %97
    %v99 = vsel %vm59, %v56, 0.0
    %100 = vadd.xlane.f32.xlu0 %v99
    %v101 = vpop.xlane.xlu0 %100
    %v102 = vsel %vm59, %v57, 0.0
    %103 = vadd.xlane.f32.xlu0 %v102
    %v104 = vpop.xlane.xlu0 %103
    %v105 = vsel %vm59, %v58, 0.0
    %106 = vadd.xlane.f32.xlu0 %v105
    %v107 = vpop.xlane.xlu0 %106
    %v108 = vmul.f32 %v42, %v42
    %v109 = vrot.slane %v108, 4
    %v110 = vadd.f32 %v108, %v109
    %v111 = vrot.slane %v110, 2
    %v112 = vadd.f32 %v110, %v111
    %v113 = vrot.slane %v112, 1
    %v114 = vadd.f32 %v112, %v113
    %v116 = vsel %vm59, %v26, 0
    %v119 = vsel %vm59, %v27, 0
    %v122 = vsel %vm59, %v28, 0
    %v125 = vsel %vm59, %v29, 0
    %v128 = vsel %vm59, %v30, 0
    %v131 = vsel %vm59, %v31, 0
    %v134 = vsel %vm59, %v32, 0
    %v137 = vsel %vm59, %v33, 0
    %v140 = vsel %vm59, %v34, 0
    %v143 = vsel %vm59, %v35, 0
    %v146 = vsel %vm59, %v36, 0
    %v149 = vsel %vm59, %v37, 0
    %v152 = vsel %vm59, %v38, 0
    %v155 = vsel %vm59, %v39, 0
    %v158 = vsel %vm59, %v40, 0
    %v161 = vsel %vm59, %v41, 0
    %163 = vmatprep.subr.mxu0 0.0
    %164 = vmatpush1.msra.mxu0 0.0
    %165 = vmatprep.subr.mxu0 0.0
    %166 = vmatpush1.msra.mxu0 0.0
    %167 = vmatprep.subr.mxu0 0.0
    %168 = vmatpush1.msra.mxu0 0.0
    %169 = vmatprep.subr.mxu0 0.0
    %170 = vmatpush1.msra.mxu0 0.0
    %171 = vmatprep.subr.mxu0 0.0
    %172 = vmatpush1.msra.mxu0 0.0
    %173 = vmatprep.subr.mxu0 0.0
    %174 = vmatpush1.msra.mxu0 0.0
    %175 = vmatprep.subr.mxu0 0.0
    %176 = vmatpush1.msra.mxu0 0.0
    %177 = vmatprep.subr.mxu0 0.0
    %178 = vmatpush1.msra.mxu0 0.0
    %179 = vmatprep.subr.mxu0 0.0
    %180 = vmatpush1.msra.mxu0 0.0
    %181 = vmatprep.subr.mxu0 0.0
    %182 = vmatpush1.msra.mxu0 0.0
    %183 = vmatprep.subr.mxu0 0.0
    %184 = vmatpush1.msra.mxu0 0.0
    %185 = vmatprep.subr.mxu0 0.0
    %186 = vmatpush1.msra.mxu0 0.0
    %187 = vmatprep.subr.mxu0 0.0
    %188 = vmatpush1.msra.mxu0 0.0
    %189 = vmatprep.subr.mxu0 0.0
    %190 = vmatpush1.msra.mxu0 0.0
    %191 = vmatprep.subr.mxu0 0.0
    %192 = vmatpush1.msra.mxu0 0.0
    %193 = vmatprep.subr.mxu0 0.0
    %194 = vmatpush1.msra.mxu0 %v42
    %195 = vmatprep.subr.mxu0 0.0
    %196 = vmatpush2.msra.mxu0 0.0
    %197 = vmatprep.subr.mxu0 0.0
    %198 = vmatpush2.msra.mxu0 0.0
    %199 = vmatprep.subr.mxu0 0.0
    %200 = vmatpush2.msra.mxu0 0.0
    %201 = vmatprep.subr.mxu0 0.0
    %202 = vmatpush2.msra.mxu0 0.0
    %203 = vmatprep.subr.mxu0 0.0
    %204 = vmatpush2.msra.mxu0 0.0
    %205 = vmatprep.subr.mxu0 0.0
    %206 = vmatpush2.msra.mxu0 0.0
    %207 = vmatprep.subr.mxu0 0.0
    %208 = vmatpush2.msra.mxu0 0.0
    %209 = vmatprep.subr.mxu0 0.0
    %210 = vmatpush2.msra.mxu0 0.0
    %211 = vmatprep.subr.mxu0 0.0
    %212 = vmatpush2.msra.mxu0 0.0
    %213 = vmatprep.subr.mxu0 0.0
    %214 = vmatpush2.msra.mxu0 0.0
    %215 = vmatprep.subr.mxu0 0.0
    %216 = vmatpush2.msra.mxu0 0.0
    %217 = vmatprep.subr.mxu0 0.0
    %218 = vmatpush2.msra.mxu0 0.0
    %219 = vmatprep.subr.mxu0 0.0
    %220 = vmatpush2.msra.mxu0 0.0
    %221 = vmatprep.subr.mxu0 0.0
    %222 = vmatpush2.msra.mxu0 0.0
    %223 = vmatprep.subr.mxu0 0.0
    %224 = vmatpush2.msra.mxu0 0.0
    %225 = vmatprep.subr.mxu0 0.0
    %226 = vmatpush2.msra.mxu0 0.0
    %227 = vmatprep.mubr.f32.mxu0 0.0
    %228 = vmatmul.mubr.f32.gmra.mxu0 %v116
    %v229 = vpop.f32.mrf.mxu0
    %v230 = vadd.f32 0.0, %v229
    %v231 = vpop.f32.mrf.mxu0
    %232 = vmatprep.mubr.f32.mxu0 0.0
    %233 = vmatmul.mubr.f32.gmra.mxu0 %v119
    %v234 = vpop.f32.mrf.mxu0
    %v235 = vadd.f32 0.0, %v234
    %v236 = vpop.f32.mrf.mxu0
    %237 = vmatprep.mubr.f32.mxu0 0.0
    %238 = vmatmul.mubr.f32.gmra.mxu0 %v122
    %v239 = vpop.f32.mrf.mxu0
    %v240 = vadd.f32 0.0, %v239
    %v241 = vpop.f32.mrf.mxu0
    %242 = vmatprep.mubr.f32.mxu0 0.0
    %243 = vmatmul.mubr.f32.gmra.mxu0 %v125
    %v244 = vpop.f32.mrf.mxu0
    %v245 = vadd.f32 0.0, %v244
    %v246 = vpop.f32.mrf.mxu0
    %247 = vmatprep.mubr.f32.mxu0 0.0
    %248 = vmatmul.mubr.f32.gmra.mxu0 %v128
    %v249 = vpop.f32.mrf.mxu0
    %v250 = vadd.f32 0.0, %v249
    %v251 = vpop.f32.mrf.mxu0
    %252 = vmatprep.mubr.f32.mxu0 0.0
    %253 = vmatmul.mubr.f32.gmra.mxu0 %v131
    %v254 = vpop.f32.mrf.mxu0
    %v255 = vadd.f32 0.0, %v254
    %v256 = vpop.f32.mrf.mxu0
    %257 = vmatprep.mubr.f32.mxu0 0.0
    %258 = vmatmul.mubr.f32.gmra.mxu0 %v134
    %v259 = vpop.f32.mrf.mxu0
    %v260 = vadd.f32 0.0, %v259
    %v261 = vpop.f32.mrf.mxu0
    %262 = vmatprep.mubr.f32.mxu0 0.0
    %263 = vmatmul.mubr.f32.gmra.mxu0 %v137
    %v264 = vpop.f32.mrf.mxu0
    %v265 = vadd.f32 0.0, %v264
    %v266 = vpop.f32.mrf.mxu0
    %267 = vmatprep.mubr.f32.mxu0 0.0
    %268 = vmatmul.mubr.f32.gmra.mxu0 %v140
    %v269 = vpop.f32.mrf.mxu0
    %v270 = vadd.f32 0.0, %v269
    %v271 = vpop.f32.mrf.mxu0
    %272 = vmatprep.mubr.f32.mxu0 0.0
    %273 = vmatmul.mubr.f32.gmra.mxu0 %v143
    %v274 = vpop.f32.mrf.mxu0
    %v275 = vadd.f32 0.0, %v274
    %v276 = vpop.f32.mrf.mxu0
    %277 = vmatprep.mubr.f32.mxu0 0.0
    %278 = vmatmul.mubr.f32.gmra.mxu0 %v146
    %v279 = vpop.f32.mrf.mxu0
    %v280 = vadd.f32 0.0, %v279
    %v281 = vpop.f32.mrf.mxu0
    %282 = vmatprep.mubr.f32.mxu0 0.0
    %283 = vmatmul.mubr.f32.gmra.mxu0 %v149
    %v284 = vpop.f32.mrf.mxu0
    %v285 = vadd.f32 0.0, %v284
    %v286 = vpop.f32.mrf.mxu0
    %287 = vmatprep.mubr.f32.mxu0 0.0
    %288 = vmatmul.mubr.f32.gmra.mxu0 %v152
    %v289 = vpop.f32.mrf.mxu0
    %v290 = vadd.f32 0.0, %v289
    %v291 = vpop.f32.mrf.mxu0
    %292 = vmatprep.mubr.f32.mxu0 0.0
    %293 = vmatmul.mubr.f32.gmra.mxu0 %v155
    %v294 = vpop.f32.mrf.mxu0
    %v295 = vadd.f32 0.0, %v294
    %v296 = vpop.f32.mrf.mxu0
    %297 = vmatprep.mubr.f32.mxu0 0.0
    %298 = vmatmul.mubr.f32.gmra.mxu0 %v158
    %v299 = vpop.f32.mrf.mxu0
    %v300 = vadd.f32 0.0, %v299
    %v301 = vpop.f32.mrf.mxu0
    %302 = vmatprep.mubr.f32.mxu0 0.0
    %303 = vmatmul.mubr.f32.gmra.mxu0 %v161
    %v304 = vpop.f32.mrf.mxu0
    %v305 = vadd.f32 0.0, %v304
    %v306 = vpop.f32.mrf.mxu0
    %307 = vdwg.mxu0
    %v308 = vadd.f32 %v62, %v114
    %v309 = vadd.f32 %v65, %v114
    %v310 = vadd.f32 %v68, %v114
    %v311 = vadd.f32 %v71, %v114
    %v312 = vadd.f32 %v74, %v114
    %v313 = vadd.f32 %v77, %v114
    %v314 = vadd.f32 %v80, %v114
    %v315 = vadd.f32 %v83, %v114
    %v316 = vadd.f32 %v86, %v114
    %v317 = vadd.f32 %v89, %v114
    %v318 = vadd.f32 %v92, %v114
    %v319 = vadd.f32 %v95, %v114
    %v320 = vadd.f32 %v98, %v114
    %v321 = vadd.f32 %v101, %v114
    %v322 = vadd.f32 %v104, %v114
    %v323 = vadd.f32 %v107, %v114
    %v324 = vmul.f32 %v230, 2.0
    %v325 = vmul.f32 %v235, 2.0
    %v326 = vmul.f32 %v240, 2.0
    %v327 = vmul.f32 %v245, 2.0
    %v328 = vmul.f32 %v250, 2.0
    %v329 = vmul.f32 %v255, 2.0
    %v330 = vmul.f32 %v260, 2.0
    %v331 = vmul.f32 %v265, 2.0
    %v332 = vmul.f32 %v270, 2.0
    %v333 = vmul.f32 %v275, 2.0
    %v334 = vmul.f32 %v280, 2.0
    %v335 = vmul.f32 %v285, 2.0
    %v336 = vmul.f32 %v290, 2.0
    %v337 = vmul.f32 %v295, 2.0
    %v338 = vmul.f32 %v300, 2.0
    %v339 = vmul.f32 %v305, 2.0
    %v340 = vsub.f32 %v308, %v324
    %v341 = vsub.f32 %v309, %v325
    %v342 = vsub.f32 %v310, %v326
    %v343 = vsub.f32 %v311, %v327
    %v344 = vsub.f32 %v312, %v328
    %v345 = vsub.f32 %v313, %v329
    %v346 = vsub.f32 %v314, %v330
    %v347 = vsub.f32 %v315, %v331
    %v348 = vsub.f32 %v316, %v332
    %v349 = vsub.f32 %v317, %v333
    %v350 = vsub.f32 %v318, %v334
    %v351 = vsub.f32 %v319, %v335
    %v352 = vsub.f32 %v320, %v336
    %v353 = vsub.f32 %v321, %v337
    %v354 = vsub.f32 %v322, %v338
    %v355 = vsub.f32 %v323, %v339
    %v356 = vmax.f32 %v340, 0.0
    %v357 = vmax.f32 %v341, 0.0
    %v358 = vmax.f32 %v342, 0.0
    %v359 = vmax.f32 %v343, 0.0
    %v360 = vmax.f32 %v344, 0.0
    %v361 = vmax.f32 %v345, 0.0
    %v362 = vmax.f32 %v346, 0.0
    %v363 = vmax.f32 %v347, 0.0
    %v364 = vmax.f32 %v348, 0.0
    %v365 = vmax.f32 %v349, 0.0
    %v366 = vmax.f32 %v350, 0.0
    %v367 = vmax.f32 %v351, 0.0
    %v368 = vmax.f32 %v352, 0.0
    %v369 = vmax.f32 %v353, 0.0
    %v370 = vmax.f32 %v354, 0.0
    %v371 = vmax.f32 %v355, 0.0
    %v372 = vsub.f32 1.0, %v356
    %v373 = vsub.f32 1.0, %v357
    %v374 = vsub.f32 1.0, %v358
    %v375 = vsub.f32 1.0, %v359
    %v376 = vsub.f32 1.0, %v360
    %v377 = vsub.f32 1.0, %v361
    %v378 = vsub.f32 1.0, %v362
    %v379 = vsub.f32 1.0, %v363
    %v380 = vsub.f32 1.0, %v364
    %v381 = vsub.f32 1.0, %v365
    %v382 = vsub.f32 1.0, %v366
    %v383 = vsub.f32 1.0, %v367
    %v384 = vsub.f32 1.0, %v368
    %v385 = vsub.f32 1.0, %v369
    %v386 = vsub.f32 1.0, %v370
    %v387 = vsub.f32 1.0, %v371
    %v388 = vmax.f32 %v372, 0.0
    %v389 = vmax.f32 %v373, 0.0
    %v390 = vmax.f32 %v374, 0.0
    %v391 = vmax.f32 %v375, 0.0
    %v392 = vmax.f32 %v376, 0.0
    %v393 = vmax.f32 %v377, 0.0
    %v394 = vmax.f32 %v378, 0.0
    %v395 = vmax.f32 %v379, 0.0
    %v396 = vmax.f32 %v380, 0.0
    %v397 = vmax.f32 %v381, 0.0
    %v398 = vmax.f32 %v382, 0.0
    %v399 = vmax.f32 %v383, 0.0
    %v400 = vmax.f32 %v384, 0.0
    %v401 = vmax.f32 %v385, 0.0
    %v402 = vmax.f32 %v386, 0.0
    %v403 = vmax.f32 %v387, 0.0
    %v404 = vlaneseq
    %v405 = vshrl.u32 %v404, 7
    %v406 = vadd.s32 %v405, 8
    %v407 = vadd.s32 %v405, 16
    %v408 = vadd.s32 %v405, 24
    %v409 = vadd.s32 %v405, 32
    %v410 = vadd.s32 %v405, 40
    %v411 = vadd.s32 %v405, 48
    %v412 = vadd.s32 %v405, 56
    %v413 = vadd.s32 %v405, 64
    %v414 = vadd.s32 %v405, 72
    %v415 = vadd.s32 %v405, 80
    %v416 = vadd.s32 %v405, 88
    %v417 = vadd.s32 %v405, 96
    %v418 = vadd.s32 %v405, 104
    %v419 = vadd.s32 %v405, 112
    %v420 = vadd.s32 %v405, 120
    %s421 = smul.u32 0, 128
    %v422 = vstv %s421
    %v423 = vadd.s32 %v405, %v422
    %v424 = vadd.s32 %v406, %v422
    %v425 = vadd.s32 %v407, %v422
    %v426 = vadd.s32 %v408, %v422
    %v427 = vadd.s32 %v409, %v422
    %v428 = vadd.s32 %v410, %v422
    %v429 = vadd.s32 %v411, %v422
    %v430 = vadd.s32 %v412, %v422
    %v431 = vadd.s32 %v413, %v422
    %v432 = vadd.s32 %v414, %v422
    %v433 = vadd.s32 %v415, %v422
    %v434 = vadd.s32 %v416, %v422
    %v435 = vadd.s32 %v417, %v422
    %v436 = vadd.s32 %v418, %v422
    %v437 = vadd.s32 %v419, %v422
    %v438 = vadd.s32 %v420, %v422
    %v439 = vlaneseq
    %v440 = vand.u32 %v439, 127
    %s441 = smul.u32 0, 128
    %v442 = vstv %s441
    %v443 = vadd.s32 %v440, %v442
    %vm444 = vcmp.lt.s32.totalorder %v423, 32
    %vm445 = vcmp.lt.s32.totalorder %v424, 32
    %vm446 = vcmp.lt.s32.totalorder %v425, 32
    %vm447 = vcmp.lt.s32.totalorder %v426, 32
    %vm448 = vcmp.lt.s32.totalorder %v427, 32
    %vm449 = vcmp.lt.s32.totalorder %v428, 32
    %vm450 = vcmp.lt.s32.totalorder %v429, 32
    %vm451 = vcmp.lt.s32.totalorder %v430, 32
    %vm452 = vcmp.lt.s32.totalorder %v431, 32
    %vm453 = vcmp.lt.s32.totalorder %v432, 32
    %vm454 = vcmp.lt.s32.totalorder %v433, 32
    %vm455 = vcmp.lt.s32.totalorder %v434, 32
    %vm456 = vcmp.lt.s32.totalorder %v435, 32
    %vm457 = vcmp.lt.s32.totalorder %v436, 32
    %vm458 = vcmp.lt.s32.totalorder %v437, 32
    %vm459 = vcmp.lt.s32.totalorder %v438, 32
    %vm460 = vcmp.lt.s32.totalorder %v443, 32
    %vm461 = vmand %vm444, %vm460
    %vm462 = vmand %vm445, %vm460
    %vm463 = vmand %vm446, %vm460
    %vm464 = vmand %vm447, %vm460
    %vm465 = vmand %vm448, %vm460
    %vm466 = vmand %vm449, %vm460
    %vm467 = vmand %vm450, %vm460
    %vm468 = vmand %vm451, %vm460
    %vm469 = vmand %vm452, %vm460
    %vm470 = vmand %vm453, %vm460
    %vm471 = vmand %vm454, %vm460
    %vm472 = vmand %vm455, %vm460
    %vm473 = vmand %vm456, %vm460
    %vm474 = vmand %vm457, %vm460
    %vm475 = vmand %vm458, %vm460
    %vm476 = vmand %vm459, %vm460
    %v477 = vsel %vm461, %v388, 0.0
    %v478 = vsel %vm462, %v389, 0.0
    %v479 = vsel %vm463, %v390, 0.0
    %v480 = vsel %vm464, %v391, 0.0
    %v481 = vsel %vm465, %v392, 0.0
    %v482 = vsel %vm466, %v393, 0.0
    %v483 = vsel %vm467, %v394, 0.0
    %v484 = vsel %vm468, %v395, 0.0
    %v485 = vsel %vm469, %v396, 0.0
    %v486 = vsel %vm470, %v397, 0.0
    %v487 = vsel %vm471, %v398, 0.0
    %v488 = vsel %vm472, %v399, 0.0
    %v489 = vsel %vm473, %v400, 0.0
    %v490 = vsel %vm474, %v401, 0.0
    %v491 = vsel %vm475, %v402, 0.0
    %v492 = vsel %vm476, %v403, 0.0
    %v493 = vld [vmem:[%s0] sm:$0xff]
    %v494 = vld [vmem:[%s0 + $0x8] sm:$0xff]
    %v495 = vld [vmem:[%s0 + $0x10] sm:$0xff]
    %v496 = vld [vmem:[%s0 + $0x18] sm:$0xff]
    %v497 = vld [vmem:[%s0 + $0x20] sm:$0xff]
    %v498 = vld [vmem:[%s0 + $0x28] sm:$0xff]
    %v499 = vld [vmem:[%s0 + $0x30] sm:$0xff]
    %v500 = vld [vmem:[%s0 + $0x38] sm:$0xff]
    %v501 = vld [vmem:[%s0 + $0x40] sm:$0xff]
    %v502 = vld [vmem:[%s0 + $0x48] sm:$0xff]
    %v503 = vld [vmem:[%s0 + $0x50] sm:$0xff]
    %v504 = vld [vmem:[%s0 + $0x58] sm:$0xff]
    %v505 = vld [vmem:[%s0 + $0x60] sm:$0xff]
    %v506 = vld [vmem:[%s0 + $0x68] sm:$0xff]
    %v507 = vld [vmem:[%s0 + $0x70] sm:$0xff]
    %v508 = vld [vmem:[%s0 + $0x78] sm:$0xff]
    %v509 = vmul.f32 %v493, %v477
    %v510 = vmul.f32 %v494, %v478
    %v511 = vmul.f32 %v495, %v479
    %v512 = vmul.f32 %v496, %v480
    %v513 = vmul.f32 %v497, %v481
    %v514 = vmul.f32 %v498, %v482
    %v515 = vmul.f32 %v499, %v483
    %v516 = vmul.f32 %v500, %v484
    %v517 = vmul.f32 %v501, %v485
    %v518 = vmul.f32 %v502, %v486
    %v519 = vmul.f32 %v503, %v487
    %v520 = vmul.f32 %v504, %v488
    %v521 = vmul.f32 %v505, %v489
    %v522 = vmul.f32 %v506, %v490
    %v523 = vmul.f32 %v507, %v491
    %v524 = vmul.f32 %v508, %v492
    %v525 = vpack.c.bf16 %v510, %v509
    %v526 = vpack.c.bf16 %v512, %v511
    %v527 = vpack.c.bf16 %v514, %v513
    %v528 = vpack.c.bf16 %v516, %v515
    %v529 = vpack.c.bf16 %v518, %v517
    %v530 = vpack.c.bf16 %v520, %v519
    %v531 = vpack.c.bf16 %v522, %v521
    %v532 = vpack.c.bf16 %v524, %v523
    %v541 = vunpack.c.l.b16 %v525
    %v542 = vunpack.c.h.b16 %v525
    %v543 = vunpack.c.l.b16 %v526
    %v544 = vunpack.c.h.b16 %v526
    %v545 = vunpack.c.l.b16 %v527
    %v546 = vunpack.c.h.b16 %v527
    %v547 = vunpack.c.l.b16 %v528
    %v548 = vunpack.c.h.b16 %v528
    %v549 = vunpack.c.l.b16 %v529
    %v550 = vunpack.c.h.b16 %v529
    %v551 = vunpack.c.l.b16 %v530
    %v552 = vunpack.c.h.b16 %v530
    %v553 = vunpack.c.l.b16 %v531
    %v554 = vunpack.c.h.b16 %v531
    %v555 = vunpack.c.l.b16 %v532
    %v556 = vunpack.c.h.b16 %v532
    %v557 = vpack.c.b16 %v541, %v541
    %v558 = vpack.c.b16 %v542, %v542
    %v559 = vpack.c.b16 %v543, %v543
    %v560 = vpack.c.b16 %v544, %v544
    %v561 = vpack.c.b16 %v545, %v545
    %v562 = vpack.c.b16 %v546, %v546
    %v563 = vpack.c.b16 %v547, %v547
    %v564 = vpack.c.b16 %v548, %v548
    %v565 = vpack.c.b16 %v549, %v549
    %v566 = vpack.c.b16 %v550, %v550
    %v567 = vpack.c.b16 %v551, %v551
    %v568 = vpack.c.b16 %v552, %v552
    %v569 = vpack.c.b16 %v553, %v553
    %v570 = vpack.c.b16 %v554, %v554
    %v571 = vpack.c.b16 %v555, %v555
    %v572 = vpack.c.b16 %v556, %v556
    %589 = vst [vmem:[#allocation2] sm:$0xf] %v557
    %590 = vst [vmem:[#allocation2 + $0x4] sm:$0xf] %v558
    %591 = vst [vmem:[#allocation2 + $0x8] sm:$0xf] %v559
    %592 = vst [vmem:[#allocation2 + $0xc] sm:$0xf] %v560
    %593 = vst [vmem:[#allocation2 + $0x10] sm:$0xf] %v561
    %594 = vst [vmem:[#allocation2 + $0x14] sm:$0xf] %v562
    %595 = vst [vmem:[#allocation2 + $0x18] sm:$0xf] %v563
    %596 = vst [vmem:[#allocation2 + $0x1c] sm:$0xf] %v564
    %597 = vst [vmem:[#allocation2 + $0x20] sm:$0xf] %v565
    %598 = vst [vmem:[#allocation2 + $0x24] sm:$0xf] %v566
    %599 = vst [vmem:[#allocation2 + $0x28] sm:$0xf] %v567
    %600 = vst [vmem:[#allocation2 + $0x2c] sm:$0xf] %v568
    %601 = vst [vmem:[#allocation2 + $0x30] sm:$0xf] %v569
    %602 = vst [vmem:[#allocation2 + $0x34] sm:$0xf] %v570
    %603 = vst [vmem:[#allocation2 + $0x38] sm:$0xf] %v571
    %604 = vst [vmem:[#allocation2 + $0x3c] sm:$0xf] %v572
    %s605 = sld [smem:[#allocation5]]
    %v606 = vmul.f32 %v477, %v477
    %v607 = vmul.f32 %v478, %v478
    %v608 = vmul.f32 %v479, %v479
    %v609 = vmul.f32 %v480, %v480
    %v610 = vmul.f32 %v481, %v481
    %v611 = vmul.f32 %v482, %v482
    %v612 = vmul.f32 %v483, %v483
    %v613 = vmul.f32 %v484, %v484
    %v614 = vmul.f32 %v485, %v485
    %v615 = vmul.f32 %v486, %v486
    %v616 = vmul.f32 %v487, %v487
    %v617 = vmul.f32 %v488, %v488
    %v618 = vmul.f32 %v489, %v489
    %v619 = vmul.f32 %v490, %v490
    %v620 = vmul.f32 %v491, %v491
    %v621 = vmul.f32 %v492, %v492
    %v622 = vadd.f32 %v606, %v607
    %v623 = vadd.f32 %v622, %v608
    %v624 = vadd.f32 %v623, %v609
    %v625 = vadd.f32 %v624, %v610
    %v626 = vadd.f32 %v625, %v611
    %v627 = vadd.f32 %v626, %v612
    %v628 = vadd.f32 %v627, %v613
    %v629 = vadd.f32 %v628, %v614
    %v630 = vadd.f32 %v629, %v615
    %v631 = vadd.f32 %v630, %v616
    %v632 = vadd.f32 %v631, %v617
    %v633 = vadd.f32 %v632, %v618
    %v634 = vadd.f32 %v633, %v619
    %v635 = vadd.f32 %v634, %v620
    %v636 = vadd.f32 %v635, %v621
    %637 = vadd.xlane.f32.xlu0 %v636
    %v638 = vpop.xlane.xlu0 %637
    %v639 = vrot.slane %v638, 4
    %v640 = vadd.f32 %v638, %v639
    %v641 = vrot.slane %v640, 2
    %v642 = vadd.f32 %v640, %v641
    %v643 = vrot.slane %v642, 1
    %v644 = vadd.f32 %v642, %v643
    %s645 = vtos %v644
    %s646 = smul.f32 %s645, 0.013
    %v647 = vmul.f32 %v493, %v493
    %v648 = vmul.f32 %v494, %v494
    %v649 = vmul.f32 %v495, %v495
    %v650 = vmul.f32 %v496, %v496
    %v651 = vmul.f32 %v497, %v497
    %v652 = vmul.f32 %v498, %v498
    %v653 = vmul.f32 %v499, %v499
    %v654 = vmul.f32 %v500, %v500
    %v655 = vmul.f32 %v501, %v501
    %v656 = vmul.f32 %v502, %v502
    %v657 = vmul.f32 %v503, %v503
    %v658 = vmul.f32 %v504, %v504
    %v659 = vmul.f32 %v505, %v505
    %v660 = vmul.f32 %v506, %v506
    %v661 = vmul.f32 %v507, %v507
    %v662 = vmul.f32 %v508, %v508
    %v663 = vadd.f32 %v647, %v648
    %v664 = vadd.f32 %v663, %v649
    %v665 = vadd.f32 %v664, %v650
    %v666 = vadd.f32 %v665, %v651
    %v667 = vadd.f32 %v666, %v652
    %v668 = vadd.f32 %v667, %v653
    %v669 = vadd.f32 %v668, %v654
    %v670 = vadd.f32 %v669, %v655
    %v671 = vadd.f32 %v670, %v656
    %v672 = vadd.f32 %v671, %v657
    %v673 = vadd.f32 %v672, %v658
    %v674 = vadd.f32 %v673, %v659
    %v675 = vadd.f32 %v674, %v660
    %v676 = vadd.f32 %v675, %v661
    %v677 = vadd.f32 %v676, %v662
    %678 = vadd.xlane.f32.xlu0 %v677
    %v679 = vpop.xlane.xlu0 %678
    %v680 = vrot.slane %v679, 4
    %v681 = vadd.f32 %v679, %v680
    %v682 = vrot.slane %v681, 2
    %v683 = vadd.f32 %v681, %v682
    %v684 = vrot.slane %v683, 1
    %v685 = vadd.f32 %v683, %v684
    %s686 = vtos %v685
    %s687 = smul.f32 %s686, 60.0
    %s688 = sadd.f32 %s646, %s687
    %s689 = sadd.f32 %s605, %s688
    %s690 = scalar_lea.smem [#allocation5], 0
    %691 = sst [smem:[%s690]] %s689
    // Predicated region
    $region18: #{tpu_custom_call.1} parent=1 // pred_check
      _
    $region19: #{tpu_custom_call.1} parent=1 // pred_check_branch
      %693 = sbr.rel (0) target = $region21
    $region20: #{tpu_custom_call.1} parent=1 // pred_region
      %s695 = ssub.s32 1024, 1024
      %696 = vsyncadd [#allocation3], %s695
      %s697 = sshll.u32 [#allocation2], 4
      %s698 = int_to_ptr.vmem [resolvable:$true] %s697
      %703 = dma.vmem_to_hbm [thread:$0]  %s698, 1024, %s3, [#allocation3], 64, 64, 4
    $region21: #{tpu_custom_call.1} parent=1 // pred_fallthru
      _
    // Predicated region
    $region22: #{tpu_custom_call.1} parent=1 // pred_check
      _
    $region23: #{tpu_custom_call.1} parent=1 // pred_check_branch
      %705 = sbr.rel (0) target = $region25
    $region24: #{tpu_custom_call.1} parent=1 // pred_region
      %s707 = ssub.s32 16, 16
      %708 = vsyncadd [#allocation4], %s707
      %711 = dma.smem_to_hbm [#allocation5], 16, %s4, [#allocation4]
    $region25: #{tpu_custom_call.1} parent=1 // pred_fallthru
      _
    // Predicated region
    $region26: #{tpu_custom_call.1} parent=1 // pred_check
      _
    $region27: #{tpu_custom_call.1} parent=1 // pred_check_branch
      %713 = sbr.rel (0) target = $region29
    $region28: #{tpu_custom_call.1} parent=1 // pred_region
      %714 = dma.done [#allocation3], 1024
    $region29: #{tpu_custom_call.1} parent=1 // pred_fallthru
      _
    // Predicated region
    $region30: #{tpu_custom_call.1} parent=1 // pred_check
      _
    $region31: #{tpu_custom_call.1} parent=1 // pred_check_branch
      %716 = sbr.rel (0) target = $region33
    $region32: #{tpu_custom_call.1} parent=1 // pred_region
      %717 = dma.done [#allocation4], 16
    $region33: #{tpu_custom_call.1} parent=1 // pred_fallthru
      _
    %718 = sfence
    %719 = vsyncpa [#allocation3], 1
    %720 = vsyncpa [#allocation4], 1

</llo_original>
